<compile_context>
chip_gen: v5e
topology: v5e:2x2
jax: 0.10.0
libtpu: 0.0.40
codegen_flags: <defaults>
</compile_context>

<pallas_src>
import jax
import jax.numpy as jnp
from jax.experimental import pallas as pl
from jax.experimental.pallas import tpu as pltpu


def _round_up(v, m):
    return ((v + m - 1) // m) * m


def _lane_align():
    """256-aligned K/N keeps the 2x256x256 MXU (v6e/v7x) full; 128 on v5e."""
    try:
        kind = jax.devices()[0].device_kind.lower()
    except Exception:
        return 128
    if any(tag in kind for tag in ("v6", "v7", "7x", "trillium")):
        return 256
    return 128


def _vmem_capacity_bytes():
    try:
        return int(pltpu.get_tpu_info().vmem_capacity_bytes)
    except Exception:
        return 64 << 20  # conservative default (v7x per-TC VMEM)


def _ffn_kernel(x_ref, w1_ref, b1_ref, w2_ref, b2_ref, o_ref, acc_ref):
    # x_ref : (tm, idim_p)     token tile (constant across the hidden axis)
    # w1_ref: (idim_p, tn_h)   W1 column panel (streamed along h)
    # b1_ref: (1, tn_h)
    # w2_ref: (tn_h, idim_p)   W2 row panel (streamed along h)
    # b2_ref: (1, idim_p)
    # acc_ref: (tm, idim_p) f32 accumulator, resident across the hidden axis
    h_idx = pl.program_id(1)

    @pl.when(h_idx == 0)
    def _():
        acc_ref[...] = jnp.zeros_like(acc_ref)

    h = jnp.dot(x_ref[...].astype(w1_ref.dtype), w1_ref[...],
                preferred_element_type=jnp.float32)
    h = h + b1_ref[...].astype(jnp.float32)
    # Fused ReLU + downcast (no separate f32 post-ReLU temp).
    h = jnp.maximum(h, 0.0).astype(w2_ref.dtype)
    # TODO(synk): dropout is identity (inference); training-mode parity would
    # need pltpu.prng_seed / pltpu.prng_random_bits masking of `h` here.
    acc_ref[...] += jnp.dot(h, w2_ref[...], preferred_element_type=jnp.float32)

    @pl.when(h_idx == pl.num_programs(1) - 1)
    def _():
        o_ref[...] = (acc_ref[...]
                      + b2_ref[...].astype(jnp.float32)).astype(o_ref.dtype)


def prepare_ffn_params(w1, b1, w2, b2, *, lane_align=None, panel=1024):
    """Pad FFN parameters once, outside the hot path.

    w1: (idim, hidden)  b1: (hidden,)  w2: (hidden, idim)  b2: (idim,)
    (PyTorch Linear weights pre-transposed to (in, out)).  Zero padding is
    numerically sound: padded hidden columns give ReLU(0)=0 and padded W2 rows
    contribute nothing; padded idim output columns are sliced off.
    """
    idim, hidden = w1.shape
    align = _lane_align() if lane_align is None else int(lane_align)
    idim_p = _round_up(idim, align)
    tn_h = _round_up(min(int(panel), _round_up(hidden, align)), align)
    hid_p = _round_up(hidden, tn_h)

    def pad2(a, r, c):
        if a.shape == (r, c):
            return a
        return jnp.zeros((r, c), a.dtype).at[:a.shape[0], :a.shape[1]].set(a)

    return dict(
        w1=pad2(w1, idim_p, hid_p),
        b1=pad2(b1.reshape(1, -1), 1, hid_p),
        w2=pad2(w2, hid_p, idim_p),
        b2=pad2(b2.reshape(1, -1), 1, idim_p),
        idim=idim, hidden=hidden, idim_p=idim_p, hid_p=hid_p, tn_h=tn_h,
    )


def positionwise_feed_forward(x, params, *, tm=512):
    """y = ReLU(x @ W1 + b1) @ W2 + b2   (dropout == identity at inference).

    x: (..., idim).  `params` comes from prepare_ffn_params (pre-padded once).
    Any float dtype; matmul accumulation is f32.
    """
    w1p, b1p, w2p, b2p = params["w1"], params["b1"], params["w2"], params["b2"]
    idim, idim_p = params["idim"], params["idim_p"]
    hid_p, tn_h = params["hid_p"], params["tn_h"]

    orig_shape = x.shape
    assert orig_shape[-1] == idim
    x2d = x.reshape(-1, idim)
    M = x2d.shape[0]

    dt = x.dtype
    wdt = w1p.dtype
    x_item = jnp.dtype(dt).itemsize
    w_item = jnp.dtype(wdt).itemsize

    # Token tile: large for throughput, sublane-aligned.  No forced 2-way
    # split (hurts single-TC v5e/v6e); on v7x realistic M gives >1 tile anyway.
    tm_eff = max(8, min(int(tm), _round_up(M, 8)))

    # Shrink the token tile if the footprint would blow the VMEM budget.
    def footprint(tm_):
        return (2 * tm_ * idim_p * x_item            # x tile (2 buffers)
                + 2 * idim_p * tn_h * w_item          # W1 panel (2 buffers)
                + 2 * tn_h * idim_p * w_item          # W2 panel (2 buffers)
                + 2 * tn_h * w_item + 2 * idim_p * w_item  # biases
                + 2 * tm_ * idim_p * x_item           # out tile (2 buffers)
                + tm_ * idim_p * 4                    # f32 accumulator
                + tm_ * tn_h * (4 + w_item))          # h f32 + downcast temp

    vmem_cap = _vmem_capacity_bytes()
    while tm_eff > 64 and footprint(tm_eff) > int(0.7 * vmem_cap):
        tm_eff = _round_up(tm_eff // 2, 8)

    M_p = _round_up(M, tm_eff)
    n_m = M_p // tm_eff
    n_h = hid_p // tn_h
    grid = (n_m, n_h)

    # Pad x only when actually needed (skip the extra HBM round-trip when
    # M and idim are already aligned, the typical transformer case).
    if (M_p, idim_p) == x2d.shape:
        xp, padded = x2d, False
    else:
        xp = jnp.zeros((M_p, idim_p), dt).at[:M, :idim].set(x2d)
        padded = True

    vmem_limit = int(min(int(0.85 * vmem_cap),
                         max(32 << 20, int(1.4 * footprint(tm_eff)))))

    cost = pl.CostEstimate(
        flops=2 * M_p * (idim_p * hid_p + hid_p * idim_p),
        transcendentals=0,
        bytes_accessed=int(2 * M_p * idim_p * x_item
                           + n_m * (idim_p * hid_p + hid_p * idim_p) * w_item),
    )

    out = pl.pallas_call(
        _ffn_kernel,
        out_shape=jax.ShapeDtypeStruct((M_p, idim_p), dt),
        grid_spec=pltpu.PrefetchScalarGridSpec(
            num_scalar_prefetch=0,
            grid=grid,
            in_specs=[
                # x tile: index constant in h -> fetched once per M tile.
                pl.BlockSpec((tm_eff, idim_p), lambda i, h: (i, 0)),
                # W1 column panels / b1 / W2 row panels streamed along h.
                pl.BlockSpec((idim_p, tn_h), lambda i, h: (0, h)),
                pl.BlockSpec((1, tn_h), lambda i, h: (0, h)),
                pl.BlockSpec((tn_h, idim_p), lambda i, h: (h, 0)),
                # b2: constant block.
                pl.BlockSpec((1, idim_p), lambda i, h: (0, 0)),
            ],
            out_specs=pl.BlockSpec((tm_eff, idim_p), lambda i, h: (i, 0)),
            scratch_shapes=[pltpu.VMEM((tm_eff, idim_p), jnp.float32)],
        ),
        compiler_params=pltpu.CompilerParams(
            dimension_semantics=("parallel", "arbitrary"),
            vmem_limit_bytes=vmem_limit,
        ),
        cost_estimate=cost,
    )(xp, w1p, b1p, w2p, b2p)

    if padded:
        out = out[:M, :idim]
    return out.reshape(orig_shape)


def reference_ffn(x, w1, b1, w2, b2):
    h = jnp.maximum(x @ w1 + b1, 0.0)
    return h @ w2 + b2


if __name__ == "__main__":
    # Small shapes consistent with the module's forward.
    batch, seq, idim, hidden_units = 2, 8, 32, 64
    dropout_rate = 0.1  # identity in the inference forward

    key = jax.random.PRNGKey(0)
    k_x, k_w1, k_b1, k_w2, k_b2 = jax.random.split(key, 5)

    x = jax.random.normal(k_x, (batch, seq, idim), dtype=jnp.float32)

    # PyTorch Linear params (w_1: (hidden, idim), w_2: (idim, hidden)) stored
    # pre-transposed as (in, out).  f32 here for a tight reference check; bf16
    # weights use the same kernel for full MXU throughput on v6e/v7x.
    w1 = (jax.random.uniform(k_w1, (idim, hidden_units), dtype=jnp.float32) - 0.5) * 0.2
    b1 = (jax.random.uniform(k_b1, (hidden_units,), dtype=jnp.float32) - 0.5) * 0.2
    w2 = (jax.random.uniform(k_w2, (hidden_units, idim), dtype=jnp.float32) - 0.5) * 0.2
    b2 = (jax.random.uniform(k_b2, (idim,), dtype=jnp.float32) - 0.5) * 0.2

    params = prepare_ffn_params(w1, b1, w2, b2)  # padded once, outside hot path
    out = positionwise_feed_forward(x, params)
    jax.block_until_ready(out)

    ref = reference_ffn(x, w1, b1, w2, b2)
    assert out.shape == x.shape
    # Tolerance accommodates MXU default-precision f32 matmul passes.
    assert jnp.allclose(out, ref, atol=5e-3, rtol=5e-3), "mismatch vs reference"

    print("KERNEL_OK")
</pallas_src>

<mosaic_0001>
module attributes {stable_mosaic.version = 11 : i64} {
  func.func @_ffn_kernel(%arg0: i32, %arg1: i32, %arg2: memref<16x128xf32, #tpu.memory_space<vmem>>, %arg3: memref<128x128xf32, #tpu.memory_space<vmem>>, %arg4: memref<1x128xf32, #tpu.memory_space<vmem>>, %arg5: memref<128x128xf32, #tpu.memory_space<vmem>>, %arg6: memref<1x128xf32, #tpu.memory_space<vmem>>, %arg7: memref<16x128xf32, #tpu.memory_space<vmem>>, %arg8: memref<16x128xf32, #tpu.memory_space<vmem>>) attributes {dimension_semantics = [#tpu.dimension_semantics<parallel>, #tpu.dimension_semantics<arbitrary>], iteration_bounds = array<i64: 1, 1>, scalar_prefetch = 0 : i64, scratch_operands = 1 : i64, tpu.core_type = #tpu.core_type<tc>, window_params = [{transform_indices = @transform_0, window_bounds = array<i64: 16, 128>}, {transform_indices = @transform_1, window_bounds = array<i64: 128, 128>}, {transform_indices = @transform_2, window_bounds = array<i64: 1, 128>}, {transform_indices = @transform_3, window_bounds = array<i64: 128, 128>}, {pipeline_mode = #tpu.pipeline_mode<synchronous>, transform_indices = @transform_4, window_bounds = array<i64: 1, 128>}, {transform_indices = @transform_5, window_bounds = array<i64: 16, 128>}]} {
    %c0_i32 = arith.constant 0 : i32
    %0 = arith.cmpi eq, %arg1, %c0_i32 : i32
    %1 = arith.extui %0 : i1 to i32
    %c0_i32_0 = arith.constant 0 : i32
    %2 = arith.cmpi ne, %1, %c0_i32_0 : i32
    scf.if %2 {
      %cst_16 = arith.constant 0.000000e+00 : f32
      %19 = vector.broadcast %cst_16 : f32 to vector<16x128xf32>
      %c0_17 = arith.constant 0 : index
      %c0_18 = arith.constant 0 : index
      %20 = vector.load %arg8[%c0_17, %c0_18] : memref<16x128xf32, #tpu.memory_space<vmem>>, vector<16x128xf32>
      tpu.vector_store %arg8[%c0_17, %c0_18], %19 {strides = array<i32>} : memref<16x128xf32, #tpu.memory_space<vmem>>, vector<16x128xf32>,
    } else {
    }
    %c0 = arith.constant 0 : index
    %c0_1 = arith.constant 0 : index
    %3 = vector.load %arg2[%c0, %c0_1] : memref<16x128xf32, #tpu.memory_space<vmem>>, vector<16x128xf32>
    %c0_2 = arith.constant 0 : index
    %c0_3 = arith.constant 0 : index
    %4 = vector.load %arg3[%c0_2, %c0_3] : memref<128x128xf32, #tpu.memory_space<vmem>>, vector<128x128xf32>
    %cst = arith.constant dense<0.000000e+00> : vector<16x128xf32>
    %5 = tpu.matmul %3, %4, %cst {dimension_numbers = #tpu.dot_dimension_numbers<[1], [0], [0], [1], [0, 0, 1, 1], [], []>} : vector<16x128xf32>, vector<128x128xf32>, vector<16x128xf32> -> vector<16x128xf32>
    %c0_4 = arith.constant 0 : index
    %c0_5 = arith.constant 0 : index
    %6 = vector.load %arg4[%c0_4, %c0_5] : memref<1x128xf32, #tpu.memory_space<vmem>>, vector<1x128xf32>
    %7 = vector.broadcast %6 : vector<1x128xf32> to vector<16x128xf32>
    %8 = arith.addf %5, %7 : vector<16x128xf32>
    %cst_6 = arith.constant 0.000000e+00 : f32
    %9 = vector.broadcast %cst_6 : f32 to vector<16x128xf32>
    %10 = arith.maximumf %8, %9 : vector<16x128xf32>
    %c0_7 = arith.constant 0 : index
    %c0_8 = arith.constant 0 : index
    %11 = vector.load %arg8[%c0_7, %c0_8] : memref<16x128xf32, #tpu.memory_space<vmem>>, vector<16x128xf32>
    %c0_9 = arith.constant 0 : index
    %c0_10 = arith.constant 0 : index
    %12 = vector.load %arg5[%c0_9, %c0_10] : memref<128x128xf32, #tpu.memory_space<vmem>>, vector<128x128xf32>
    %cst_11 = arith.constant dense<0.000000e+00> : vector<16x128xf32>
    %13 = tpu.matmul %10, %12, %cst_11 {dimension_numbers = #tpu.dot_dimension_numbers<[1], [0], [0], [1], [0, 0, 1, 1], [], []>} : vector<16x128xf32>, vector<128x128xf32>, vector<16x128xf32> -> vector<16x128xf32>
    %14 = arith.addf %11, %13 : vector<16x128xf32>
    %c0_12 = arith.constant 0 : index
    %c0_13 = arith.constant 0 : index
    %15 = vector.load %arg8[%c0_12, %c0_13] : memref<16x128xf32, #tpu.memory_space<vmem>>, vector<16x128xf32>
    tpu.vector_store %arg8[%c0_12, %c0_13], %14 {strides = array<i32>} : memref<16x128xf32, #tpu.memory_space<vmem>>, vector<16x128xf32>,
    %c0_i32_14 = arith.constant 0 : i32
    %16 = arith.cmpi eq, %arg1, %c0_i32_14 : i32
    %17 = arith.extui %16 : i1 to i32
    %c0_i32_15 = arith.constant 0 : i32
    %18 = arith.cmpi ne, %17, %c0_i32_15 : i32
    scf.if %18 {
      %c0_16 = arith.constant 0 : index
      %c0_17 = arith.constant 0 : index
      %19 = vector.load %arg8[%c0_16, %c0_17] : memref<16x128xf32, #tpu.memory_space<vmem>>, vector<16x128xf32>
      %c0_18 = arith.constant 0 : index
      %c0_19 = arith.constant 0 : index
      %20 = vector.load %arg6[%c0_18, %c0_19] : memref<1x128xf32, #tpu.memory_space<vmem>>, vector<1x128xf32>
      %21 = vector.broadcast %20 : vector<1x128xf32> to vector<16x128xf32>
      %22 = arith.addf %19, %21 : vector<16x128xf32>
      %c0_20 = arith.constant 0 : index
      %c0_21 = arith.constant 0 : index
      %23 = vector.load %arg7[%c0_20, %c0_21] : memref<16x128xf32, #tpu.memory_space<vmem>>, vector<16x128xf32>
      tpu.vector_store %arg7[%c0_20, %c0_21], %22 {strides = array<i32>} : memref<16x128xf32, #tpu.memory_space<vmem>>, vector<16x128xf32>,
    } else {
    }
    return
  }
  func.func @transform_0(%arg0: i32, %arg1: i32) -> (i32, i32) {
    %c0_i32 = arith.constant 0 : i32
    %c0_i32_0 = arith.constant 0 : i32
    return %arg0, %c0_i32 : i32, i32
  }
  func.func @transform_1(%arg0: i32, %arg1: i32) -> (i32, i32) {
    %c0_i32 = arith.constant 0 : i32
    %c0_i32_0 = arith.constant 0 : i32
    return %c0_i32, %arg1 : i32, i32
  }
  func.func @transform_2(%arg0: i32, %arg1: i32) -> (i32, i32) {
    %c0_i32 = arith.constant 0 : i32
    %c0_i32_0 = arith.constant 0 : i32
    return %c0_i32, %arg1 : i32, i32
  }
  func.func @transform_3(%arg0: i32, %arg1: i32) -> (i32, i32) {
    %c0_i32 = arith.constant 0 : i32
    %c0_i32_0 = arith.constant 0 : i32
    return %arg1, %c0_i32 : i32, i32
  }
  func.func @transform_4(%arg0: i32, %arg1: i32) -> (i32, i32) {
    %c0_i32 = arith.constant 0 : i32
    %c0_i32_0 = arith.constant 0 : i32
    %c0_i32_1 = arith.constant 0 : i32
    return %c0_i32, %c0_i32_0 : i32, i32
  }
  func.func @transform_5(%arg0: i32, %arg1: i32) -> (i32, i32) {
    %c0_i32 = arith.constant 0 : i32
    %c0_i32_0 = arith.constant 0 : i32
    return %arg0, %c0_i32 : i32, i32
  }
}

</mosaic_0001>

<llo_original>
// kernel: tpu_custom_call.1
$region0: #{tpu_custom_call.1}
  #allocation0 [shape = 'u32[]', space=smem, size = 0x4, offset = 0x4, fixed_abs, tag = 'smem constant byte address 0x4 - core index']
  #allocation1 [shape = 'u32[72,128]{1,0:T(1,128)}', space=vmem, size = 0x9000, scoped, tag = 'internal scratch']
  #allocation2 [shape = 'f32[16,128]{1,0:T(8,128)}', space=vmem, size = 0x2000, scoped, tag = 'scratch operand']
  %s0 = inlined_call_operand.hbm [shape: f32[16,128], index: 0, kind: input, shape index: {}]
  %s1 = inlined_call_operand.hbm [shape: f32[128,128], index: 1, kind: input, shape index: {}]
  %s2 = inlined_call_operand.vmem [shape: f32[1,128], index: 2, kind: input, shape index: {}]
  %s3 = inlined_call_operand.hbm [shape: f32[128,128], index: 3, kind: input, shape index: {}]
  %s4 = inlined_call_operand.vmem [shape: f32[1,128], index: 4, kind: input, shape index: {}]
  %s5 = inlined_call_operand.hbm [shape: f32[16,128], index: 5, kind: output, shape index: {}]
  %s6 = sld [smem:[#allocation0]]
  $region50: #{tpu_custom_call.1} parent=0
    _
  %s8 = ssub.s32 1, %s6
  %s9 = scalar_select 0, %s8, %s6
  $region1: #{tpu_custom_call.1} parent=0
    #allocation3 [shape = 'u8[8192]{0}', space=vmem, size = 0x2000, scoped, tag = 'input window, operand 0, single buffered']
    #allocation4 [shape = 's32[1]{0}', space=sflag, size = 0x4, scoped, tag = 'scoped memory for tpu_custom_call.1']
    #allocation5 [shape = 's32[1]{0}', space=sflag, size = 0x4, scoped, tag = 'scoped memory for tpu_custom_call.1']
    #allocation6 [shape = 'u8[65536]{0}', space=vmem, size = 0x10000, scoped, tag = 'input window, operand 1, single buffered']
    #allocation7 [shape = 's32[1]{0}', space=sflag, size = 0x4, scoped, tag = 'scoped memory for tpu_custom_call.1']
    #allocation8 [shape = 'u8[65536]{0}', space=vmem, size = 0x10000, scoped, tag = 'input window, operand 3, single buffered']
    #allocation9 [shape = 'u8[8192]{0}', space=vmem, size = 0x2000, scoped, tag = 'output window, operand 0, single buffered']
    %10 = vsyncpa [#allocation4], 0
    %11 = vsyncpa [#allocation7], 0
    %12 = vsyncpa [#allocation5], 0
    // Predicated region
    $region2: #{tpu_custom_call.1} parent=1 // pred_check
      _
    $region3: #{tpu_custom_call.1} parent=1 // pred_check_branch
      %14 = sbr.rel (0) target = $region5
    $region4: #{tpu_custom_call.1} parent=1 // pred_region
      %16 = vsyncadd [#allocation4], 0
      %s17 = sshll.u32 %s0, 4
      %s18 = int_to_ptr.hbm [resolvable:$true] %s17
      %s19 = sshll.u32 [#allocation3], 4
      %s20 = int_to_ptr.vmem [resolvable:$true] %s19
      %25 = dma.hbm_to_vmem [thread:$0]  %s18, 256, %s20, [#allocation4], 128, 128, 8
    $region5: #{tpu_custom_call.1} parent=1 // pred_fallthru
      _
    // Predicated region
    $region6: #{tpu_custom_call.1} parent=1 // pred_check
      _
    $region7: #{tpu_custom_call.1} parent=1 // pred_check_branch
      %27 = sbr.rel (0) target = $region9
    $region8: #{tpu_custom_call.1} parent=1 // pred_region
      %29 = vsyncadd [#allocation7], 0
      %s30 = sshll.u32 %s1, 4
      %s31 = int_to_ptr.hbm [resolvable:$true] %s30
      %s32 = sshll.u32 [#allocation6], 4
      %s33 = int_to_ptr.vmem [resolvable:$true] %s32
      %38 = dma.hbm_to_vmem [thread:$0]  %s31, 2048, %s33, [#allocation7], 128, 128, 8
    $region9: #{tpu_custom_call.1} parent=1 // pred_fallthru
      _
    // Predicated region
    $region10: #{tpu_custom_call.1} parent=1 // pred_check
      _
    $region11: #{tpu_custom_call.1} parent=1 // pred_check_branch
      %40 = sbr.rel (0) target = $region13
    $region12: #{tpu_custom_call.1} parent=1 // pred_region
      _
    $region13: #{tpu_custom_call.1} parent=1 // pred_fallthru
      _
    // Predicated region
    $region14: #{tpu_custom_call.1} parent=1 // pred_check
      _
    $region15: #{tpu_custom_call.1} parent=1 // pred_check_branch
      %42 = sbr.rel (0) target = $region17
    $region16: #{tpu_custom_call.1} parent=1 // pred_region
      %44 = vsyncadd [#allocation7], 0
      %s45 = sshll.u32 %s3, 4
      %s46 = int_to_ptr.hbm [resolvable:$true] %s45
      %s47 = sshll.u32 [#allocation8], 4
      %s48 = int_to_ptr.vmem [resolvable:$true] %s47
      %53 = dma.hbm_to_vmem [thread:$0]  %s46, 2048, %s48, [#allocation7], 128, 128, 8
    $region17: #{tpu_custom_call.1} parent=1 // pred_fallthru
      _
    // Predicated region
    $region18: #{tpu_custom_call.1} parent=1 // pred_check
      _
    $region19: #{tpu_custom_call.1} parent=1 // pred_check_branch
      %55 = sbr.rel (0) target = $region21
    $region20: #{tpu_custom_call.1} parent=1 // pred_region
      _
    $region21: #{tpu_custom_call.1} parent=1 // pred_fallthru
      _
    // Predicated region
    $region22: #{tpu_custom_call.1} parent=1 // pred_check
      _
    $region23: #{tpu_custom_call.1} parent=1 // pred_check_branch
      %57 = sbr.rel (0) target = $region25
    $region24: #{tpu_custom_call.1} parent=1 // pred_region
      %59 = dma.done [#allocation4], 256
    $region25: #{tpu_custom_call.1} parent=1 // pred_fallthru
      _
    // Predicated region
    $region26: #{tpu_custom_call.1} parent=1 // pred_check
      _
    $region27: #{tpu_custom_call.1} parent=1 // pred_check_branch
      %61 = sbr.rel (0) target = $region29
    $region28: #{tpu_custom_call.1} parent=1 // pred_region
      %63 = dma.done [#allocation7], 2048
    $region29: #{tpu_custom_call.1} parent=1 // pred_fallthru
      _
    // Predicated region
    $region30: #{tpu_custom_call.1} parent=1 // pred_check
      _
    $region31: #{tpu_custom_call.1} parent=1 // pred_check_branch
      %65 = sbr.rel (0) target = $region33
    $region32: #{tpu_custom_call.1} parent=1 // pred_region
      %67 = dma.done [#allocation7], 2048
    $region33: #{tpu_custom_call.1} parent=1 // pred_fallthru
      _
    %p68 = scmp.eq.s32.totalorder 0, 0
    // Predicated region
    $region34: #{tpu_custom_call.1} parent=1 // pred_check
      %p69 = pneg %p68
    $region35: #{tpu_custom_call.1} parent=1 // pred_check_branch
      %71 = sbr.rel (%p69) target = $region37
    $region36: #{tpu_custom_call.1} parent=1 // pred_region
      %72 = vst [vmem:[#allocation2] sm:$0xff] 0.0
      %73 = vst [vmem:[#allocation2 + $0x8] sm:$0xff] 0.0
    $region37: #{tpu_custom_call.1} parent=1 // pred_fallthru
      _
    %v74 = vld [vmem:[#allocation3] sm:$0xff]
    %v75 = vld [vmem:[#allocation3 + $0x8] sm:$0xff]
    %v76 = vld [vmem:[#allocation6] sm:$0xff]
    %v77 = vld [vmem:[#allocation6 + $0x8] sm:$0xff]
    %v78 = vld [vmem:[#allocation6 + $0x10] sm:$0xff]
    %v79 = vld [vmem:[#allocation6 + $0x18] sm:$0xff]
    %v80 = vld [vmem:[#allocation6 + $0x20] sm:$0xff]
    %v81 = vld [vmem:[#allocation6 + $0x28] sm:$0xff]
    %v82 = vld [vmem:[#allocation6 + $0x30] sm:$0xff]
    %v83 = vld [vmem:[#allocation6 + $0x38] sm:$0xff]
    %v84 = vld [vmem:[#allocation6 + $0x40] sm:$0xff]
    %v85 = vld [vmem:[#allocation6 + $0x48] sm:$0xff]
    %v86 = vld [vmem:[#allocation6 + $0x50] sm:$0xff]
    %v87 = vld [vmem:[#allocation6 + $0x58] sm:$0xff]
    %v88 = vld [vmem:[#allocation6 + $0x60] sm:$0xff]
    %v89 = vld [vmem:[#allocation6 + $0x68] sm:$0xff]
    %v90 = vld [vmem:[#allocation6 + $0x70] sm:$0xff]
    %v91 = vld [vmem:[#allocation6 + $0x78] sm:$0xff]
    %v92 = vld [vmem:[%s2] sm:$0x1]
    %v94 = vperm.slane %v92, 0
    %96 = vmatpush.msra.mxu0 %v91
    %97 = vmatpush.msra.mxu0 %v90
    %98 = vmatpush.msra.mxu0 %v89
    %99 = vmatpush.msra.mxu0 %v88
    %100 = vmatpush.msra.mxu0 %v87
    %101 = vmatpush.msra.mxu0 %v86
    %102 = vmatpush.msra.mxu0 %v85
    %103 = vmatpush.msra.mxu0 %v84
    %104 = vmatpush.msra.mxu0 %v83
    %105 = vmatpush.msra.mxu0 %v82
    %106 = vmatpush.msra.mxu0 %v81
    %107 = vmatpush.msra.mxu0 %v80
    %108 = vmatpush.msra.mxu0 %v79
    %109 = vmatpush.msra.mxu0 %v78
    %110 = vmatpush.msra.mxu0 %v77
    %111 = vmatpush.msra.mxu0 %v76
    %112 = vmatmul.f32.gmra.mxu0 %v74
    %v113 = vpop.f32.mrf.mxu0
    %v114 = vadd.f32 %v94, %v113
    %115 = vmatmul.f32.gmra.mxu0 %v75
    %v116 = vpop.f32.mrf.mxu0
    %v117 = vadd.f32 %v94, %v116
    %118 = vdwg.mxu0
    %v119 = vmax.f32 %v114, 0.0
    %v120 = vmax.f32 %v117, 0.0
    %v121 = vld [vmem:[#allocation2] sm:$0xff]
    %v122 = vld [vmem:[#allocation2 + $0x8] sm:$0xff]
    %v123 = vld [vmem:[#allocation8] sm:$0xff]
    %v124 = vld [vmem:[#allocation8 + $0x8] sm:$0xff]
    %v125 = vld [vmem:[#allocation8 + $0x10] sm:$0xff]
    %v126 = vld [vmem:[#allocation8 + $0x18] sm:$0xff]
    %v127 = vld [vmem:[#allocation8 + $0x20] sm:$0xff]
    %v128 = vld [vmem:[#allocation8 + $0x28] sm:$0xff]
    %v129 = vld [vmem:[#allocation8 + $0x30] sm:$0xff]
    %v130 = vld [vmem:[#allocation8 + $0x38] sm:$0xff]
    %v131 = vld [vmem:[#allocation8 + $0x40] sm:$0xff]
    %v132 = vld [vmem:[#allocation8 + $0x48] sm:$0xff]
    %v133 = vld [vmem:[#allocation8 + $0x50] sm:$0xff]
    %v134 = vld [vmem:[#allocation8 + $0x58] sm:$0xff]
    %v135 = vld [vmem:[#allocation8 + $0x60] sm:$0xff]
    %v136 = vld [vmem:[#allocation8 + $0x68] sm:$0xff]
    %v137 = vld [vmem:[#allocation8 + $0x70] sm:$0xff]
    %v138 = vld [vmem:[#allocation8 + $0x78] sm:$0xff]
    %139 = vmatpush.msra.mxu0 %v138
    %140 = vmatpush.msra.mxu0 %v137
    %141 = vmatpush.msra.mxu0 %v136
    %142 = vmatpush.msra.mxu0 %v135
    %143 = vmatpush.msra.mxu0 %v134
    %144 = vmatpush.msra.mxu0 %v133
    %145 = vmatpush.msra.mxu0 %v132
    %146 = vmatpush.msra.mxu0 %v131
    %147 = vmatpush.msra.mxu0 %v130
    %148 = vmatpush.msra.mxu0 %v129
    %149 = vmatpush.msra.mxu0 %v128
    %150 = vmatpush.msra.mxu0 %v127
    %151 = vmatpush.msra.mxu0 %v126
    %152 = vmatpush.msra.mxu0 %v125
    %153 = vmatpush.msra.mxu0 %v124
    %154 = vmatpush.msra.mxu0 %v123
    %155 = vmatmul.f32.gmra.mxu0 %v119
    %v156 = vpop.f32.mrf.mxu0
    %v157 = vadd.f32 0.0, %v156
    %158 = vmatmul.f32.gmra.mxu0 %v120
    %v159 = vpop.f32.mrf.mxu0
    %v160 = vadd.f32 0.0, %v159
    %161 = vdwg.mxu0
    %v162 = vadd.f32 %v121, %v157
    %v163 = vadd.f32 %v122, %v160
    %164 = vst [vmem:[#allocation2] sm:$0xff] %v162
    %165 = vst [vmem:[#allocation2 + $0x8] sm:$0xff] %v163
    // Predicated region
    $region38: #{tpu_custom_call.1} parent=1 // pred_check
      %p166 = pneg %p68
    $region39: #{tpu_custom_call.1} parent=1 // pred_check_branch
      %168 = sbr.rel (%p166) target = $region41
    $region40: #{tpu_custom_call.1} parent=1 // pred_region
      %v169 = vld [vmem:[#allocation2] sm:$0xff]
      %v170 = vld [vmem:[#allocation2 + $0x8] sm:$0xff]
      %v171 = vld [vmem:[%s4] sm:$0x1]
      %v173 = vperm.slane %v171, 0
      %v175 = vadd.f32 %v169, %v173
      %v176 = vadd.f32 %v170, %v173
      %177 = vst [vmem:[#allocation9] sm:$0xff] %v175
      %178 = vst [vmem:[#allocation9 + $0x8] sm:$0xff] %v176
    $region41: #{tpu_custom_call.1} parent=1 // pred_fallthru
      _
    // Predicated region
    $region42: #{tpu_custom_call.1} parent=1 // pred_check
      _
    $region43: #{tpu_custom_call.1} parent=1 // pred_check_branch
      %180 = sbr.rel (0) target = $region45
    $region44: #{tpu_custom_call.1} parent=1 // pred_region
      %182 = vsyncadd [#allocation5], 0
      %s183 = sshll.u32 [#allocation9], 4
      %s184 = int_to_ptr.vmem [resolvable:$true] %s183
      %s185 = sshll.u32 %s5, 4
      %s186 = int_to_ptr.hbm [resolvable:$true] %s185
      %191 = dma.vmem_to_hbm [thread:$0]  %s184, 256, %s186, [#allocation5], 128, 128, 8
    $region45: #{tpu_custom_call.1} parent=1 // pred_fallthru
      _
    // Predicated region
    $region46: #{tpu_custom_call.1} parent=1 // pred_check
      _
    $region47: #{tpu_custom_call.1} parent=1 // pred_check_branch
      %193 = sbr.rel (0) target = $region49
    $region48: #{tpu_custom_call.1} parent=1 // pred_region
      %195 = dma.done [#allocation5], 256
    $region49: #{tpu_custom_call.1} parent=1 // pred_fallthru
      _
    %196 = vsyncpa [#allocation4], 1
    %197 = vsyncpa [#allocation7], 1
    %198 = vsyncpa [#allocation5], 1

</llo_original>
